<compile_context>
chip_gen: v6e
topology: v6e:2x2x1
jax: 0.10.0
libtpu: 0.0.40
codegen_flags: <defaults>
</compile_context>

<pallas_src>
import functools

import jax
import jax.numpy as jnp
from jax import lax
from jax.experimental import pallas as pl
from jax.experimental.pallas import tpu as pltpu


def _similarity_attention_kernel(
    wrt_ref, cand_ref, out_ref, m_sc, l_sc, acc_sc, *, actual_l, block_l
):
    # wrt_ref:  (TB, D)      block of wrt vectors (constant across the L axis)
    # cand_ref: (TB, TL, D)  one candidate chunk
    # out_ref:  (TB, D)      written only on the last L step
    # m_sc, l_sc: (TB, 1) f32 running max / running denom
    # acc_sc:     (TB, D) f32 running unnormalized weighted sum
    li = pl.program_id(1)

    @pl.when(li == 0)
    def _():
        m_sc[...] = jnp.full_like(m_sc, -jnp.inf)
        l_sc[...] = jnp.zeros_like(l_sc)
        acc_sc[...] = jnp.zeros_like(acc_sc)

    wrt = wrt_ref[...].astype(jnp.float32)                 # (TB, D)
    cand = cand_ref[...].astype(jnp.float32)               # (TB, TL, D) one chunk

    # scores[b, l] = <cand[b, l, :], wrt[b, :]>; keep L on the sublane axis.
    s = jnp.sum(cand * wrt[:, None, :], axis=-1, keepdims=True)   # (TB, TL, 1)

    # Mask padded L rows (only traced when L was padded).
    if actual_l % block_l != 0:
        row = li * block_l + lax.broadcasted_iota(jnp.int32, s.shape, 1)
        s = jnp.where(row < actual_l, s, -jnp.inf)

    # Online (flash-style) softmax update.
    m_prev = m_sc[...]                                     # (TB, 1)
    m_new = jnp.maximum(m_prev, jnp.max(s, axis=1))        # (TB, 1)
    alpha = jnp.exp(m_prev - m_new)                        # (TB, 1)
    p = jnp.exp(s - m_new[:, None, :])                     # (TB, TL, 1)

    l_sc[...] = alpha * l_sc[...] + jnp.sum(p, axis=1)             # (TB, 1)
    acc_sc[...] = alpha * acc_sc[...] + jnp.sum(p * cand, axis=1)  # (TB, D)
    m_sc[...] = m_new

    @pl.when(li == pl.num_programs(1) - 1)
    def _():
        denom = l_sc[...]
        inv = pl.reciprocal(denom, approx=True)            # EUP vrcp (free slot)
        inv = inv * (2.0 - denom * inv)                    # one Newton step -> f32 exact
        out_ref[...] = (acc_sc[...] * inv).astype(out_ref.dtype)


# ~2 MiB of f32-equivalent candidate elements per grid step: big enough that
# the ~0.35 us per-step overhead is <5% at HBM roofline on all generations,
# small enough that the in-kernel f32 temporaries + double-buffered input
# stay far inside v7x's 64 MiB VMEM.
_F32_BLOCK_ELEMS = 512 * 1024


def _choose_blocks(B, L, D):
    """Pick (TB, TL): batch / sequence block sizes per grid step."""
    per_batch = L * D
    tb_fit = _F32_BLOCK_ELEMS // max(per_batch, 1)
    if tb_fit >= B:
        tb, tl = B, L
        # Keep >=2 grid steps for reasonably sized batches so pipelining (and
        # v7x's 2 TensorCores) have something to overlap / split.
        if B >= 16:
            tb = max(8, ((B // 2) // 8) * 8)
    elif tb_fit >= 8:
        # Whole-L slabs, multiple batch rows per step (multiple of 8 for the
        # sublane rule on the (TB, D) wrt/out blocks).
        tb, tl = (tb_fit // 8) * 8, L
    else:
        # Per-batch slab too large: tile the L axis instead (online softmax).
        tb = B if B < 8 else 8
        tl = _F32_BLOCK_ELEMS // (tb * D)
        tl = max(8, (tl // 8) * 8)
        tl = min(tl, L)
    return tb, tl


def _vmem_limit_bytes(tb, tl, D, itemsize):
    """Estimate real VMEM use (double buffers + in-kernel f32 temps) + headroom."""
    cand_block = tb * tl * D
    est = (
        2 * cand_block * itemsize      # double-buffered candidate input block
        + 3 * cand_block * 4           # f32 cast + two elementwise products (one chunk)
        + 4 * tb * D * itemsize        # wrt / out double buffers
        + (tb * D + 4 * tb) * 4        # f32 scratch accumulators
    )
    est = (est * 3) // 2 + (4 << 20)   # headroom for compiler scratch
    # >=32 MiB (raises v5e's 16 MiB scoped default), <=48 MiB (safe on v7x's
    # 64 MiB physical VMEM).
    return int(max(32 << 20, min(est, 48 << 20)))


def similarity_attention(
    wrt_vector, candidate_vector, *, block_b=None, block_l=None, core_parallel=False
):
    """wrt_vector: (B, D); candidate_vector: (B, L, D) -> (B, D)."""
    B, D = wrt_vector.shape
    Bc, L, Dc = candidate_vector.shape
    assert (B, D) == (Bc, Dc), "wrt_vector / candidate_vector shape mismatch"

    tb, tl = _choose_blocks(B, L, D)
    if block_b is not None:
        tb = max(1, min(int(block_b), B))
    if block_l is not None:
        tl = max(1, min(int(block_l), L))

    B_pad = pl.cdiv(B, tb) * tb
    L_pad = pl.cdiv(L, tl) * tl

    # Zero-pad batch and/or sequence so they tile evenly. Padded L rows are
    # masked to -inf inside the kernel (so they never touch the softmax);
    # padded batch rows give a uniform softmax over zero vectors -> zero
    # outputs, sliced off below.
    wrt_in, cand_in = wrt_vector, candidate_vector
    if B_pad != B or L_pad != L:
        wrt_in = jnp.pad(wrt_vector, ((0, B_pad - B), (0, 0)))
        cand_in = jnp.pad(
            candidate_vector, ((0, B_pad - B), (0, L_pad - L), (0, 0))
        )

    itemsize = jnp.dtype(candidate_vector.dtype).itemsize
    vmem_limit = _vmem_limit_bytes(tb, tl, D, itemsize)

    kernel = functools.partial(
        _similarity_attention_kernel, actual_l=L, block_l=tl
    )

    batch_sem = pltpu.CORE_PARALLEL if core_parallel else "parallel"

    out = pl.pallas_call(
        kernel,
        out_shape=jax.ShapeDtypeStruct((B_pad, D), wrt_vector.dtype),
        grid_spec=pltpu.PrefetchScalarGridSpec(
            num_scalar_prefetch=0,
            grid=(B_pad // tb, L_pad // tl),
            in_specs=[
                pl.BlockSpec((tb, D), lambda b, l: (b, 0)),
                pl.BlockSpec((tb, tl, D), lambda b, l: (b, l, 0)),
            ],
            out_specs=pl.BlockSpec((tb, D), lambda b, l: (b, 0)),
            scratch_shapes=[
                pltpu.VMEM((tb, 1), jnp.float32),   # running max
                pltpu.VMEM((tb, 1), jnp.float32),   # running denom
                pltpu.VMEM((tb, D), jnp.float32),   # running weighted sum
            ],
        ),
        compiler_params=pltpu.CompilerParams(
            # Batch blocks independent; L axis is the (sequential) reduction.
            dimension_semantics=(batch_sem, "arbitrary"),
            vmem_limit_bytes=vmem_limit,
        ),
    )(wrt_in, cand_in)

    return out if B_pad == B else out[:B]


def _reference(wrt_vector, candidate_vector):
    scores = jnp.einsum("bld,bd->bl", candidate_vector, wrt_vector)
    weights = jax.nn.softmax(scores, axis=1)
    return jnp.einsum("bl,bld->bd", weights, candidate_vector)


if __name__ == "__main__":
    key = jax.random.PRNGKey(0)
    k1, k2, k3, k4 = jax.random.split(key, 4)

    # Primary small-shape check.
    B, L, D = 2, 8, 32
    wrt = jax.random.normal(k1, (B, D), dtype=jnp.float32)
    cand = jax.random.normal(k2, (B, L, D), dtype=jnp.float32)

    out = similarity_attention(wrt, cand)
    jax.block_until_ready(out)

    ref = _reference(wrt, cand)
    assert out.shape == (B, D)
    assert jnp.allclose(out, ref, atol=1e-4, rtol=1e-4), "mismatch vs reference"

    # Secondary check: force the L-tiled online-softmax path (grid=(1,3),
    # with L padding + masking) to exercise the accumulator code path.
    B2, L2, D2 = 4, 20, 32
    wrt2 = jax.random.normal(k3, (B2, D2), dtype=jnp.float32)
    cand2 = jax.random.normal(k4, (B2, L2, D2), dtype=jnp.float32)

    out2 = similarity_attention(wrt2, cand2, block_b=B2, block_l=8)
    jax.block_until_ready(out2)

    ref2 = _reference(wrt2, cand2)
    assert out2.shape == (B2, D2)
    assert jnp.allclose(out2, ref2, atol=1e-4, rtol=1e-4), "mismatch (L-tiled path)"

    print("KERNEL_OK")
</pallas_src>

<mosaic_0001>
module attributes {stable_mosaic.version = 11 : i64} {
  func.func @_similarity_attention_kernel(%arg0: i32, %arg1: i32, %arg2: memref<2x32xf32, #tpu.memory_space<vmem>>, %arg3: memref<2x8x32xf32, #tpu.memory_space<vmem>>, %arg4: memref<2x32xf32, #tpu.memory_space<vmem>>, %arg5: memref<2x1xf32, #tpu.memory_space<vmem>>, %arg6: memref<2x1xf32, #tpu.memory_space<vmem>>, %arg7: memref<2x32xf32, #tpu.memory_space<vmem>>) attributes {dimension_semantics = [#tpu.dimension_semantics<parallel>, #tpu.dimension_semantics<arbitrary>], iteration_bounds = array<i64: 1, 1>, scalar_prefetch = 0 : i64, scratch_operands = 3 : i64, tpu.core_type = #tpu.core_type<tc>, window_params = [{transform_indices = @transform_0, window_bounds = array<i64: 2, 32>}, {transform_indices = @transform_1, window_bounds = array<i64: 2, 8, 32>}, {transform_indices = @transform_2, window_bounds = array<i64: 2, 32>}]} {
    %c0_i32 = arith.constant 0 : i32
    %0 = arith.cmpi eq, %arg1, %c0_i32 : i32
    %1 = arith.extui %0 : i1 to i32
    %c0_i32_0 = arith.constant 0 : i32
    %2 = arith.cmpi ne, %1, %c0_i32_0 : i32
    scf.if %2 {
      %cst_22 = arith.constant 0xFF800000 : f32
      %36 = vector.broadcast %cst_22 : f32 to vector<2x1xf32>
      %c0_23 = arith.constant 0 : index
      %c0_24 = arith.constant 0 : index
      %37 = vector.load %arg5[%c0_23, %c0_24] : memref<2x1xf32, #tpu.memory_space<vmem>>, vector<2x1xf32>
      tpu.vector_store %arg5[%c0_23, %c0_24], %36 {strides = array<i32>} : memref<2x1xf32, #tpu.memory_space<vmem>>, vector<2x1xf32>,
      %cst_25 = arith.constant 0.000000e+00 : f32
      %38 = vector.broadcast %cst_25 : f32 to vector<2x1xf32>
      %c0_26 = arith.constant 0 : index
      %c0_27 = arith.constant 0 : index
      %39 = vector.load %arg6[%c0_26, %c0_27] : memref<2x1xf32, #tpu.memory_space<vmem>>, vector<2x1xf32>
      tpu.vector_store %arg6[%c0_26, %c0_27], %38 {strides = array<i32>} : memref<2x1xf32, #tpu.memory_space<vmem>>, vector<2x1xf32>,
      %cst_28 = arith.constant 0.000000e+00 : f32
      %40 = vector.broadcast %cst_28 : f32 to vector<2x32xf32>
      %c0_29 = arith.constant 0 : index
      %c0_30 = arith.constant 0 : index
      %41 = vector.load %arg7[%c0_29, %c0_30] : memref<2x32xf32, #tpu.memory_space<vmem>>, vector<2x32xf32>
      tpu.vector_store %arg7[%c0_29, %c0_30], %40 {strides = array<i32>} : memref<2x32xf32, #tpu.memory_space<vmem>>, vector<2x32xf32>,
    } else {
    }
    %c0 = arith.constant 0 : index
    %c0_1 = arith.constant 0 : index
    %3 = vector.load %arg2[%c0, %c0_1] : memref<2x32xf32, #tpu.memory_space<vmem>>, vector<2x32xf32>
    %c0_2 = arith.constant 0 : index
    %c0_3 = arith.constant 0 : index
    %c0_4 = arith.constant 0 : index
    %4 = vector.load %arg3[%c0_2, %c0_3, %c0_4] : memref<2x8x32xf32, #tpu.memory_space<vmem>>, vector<2x8x32xf32>
    %5 = vector.shape_cast %3 : vector<2x32xf32> to vector<2x1x32xf32>
    %6 = vector.broadcast %5 : vector<2x1x32xf32> to vector<2x8x32xf32>
    %7 = arith.mulf %4, %6 : vector<2x8x32xf32>
    %cst = arith.constant dense<0.000000e+00> : vector<2x8xf32>
    %8 = vector.multi_reduction <add>, %7, %cst [2] : vector<2x8x32xf32> to vector<2x8xf32>
    %9 = vector.shape_cast %8 : vector<2x8xf32> to vector<2x8x1xf32>
    %c0_5 = arith.constant 0 : index
    %c0_6 = arith.constant 0 : index
    %10 = vector.load %arg5[%c0_5, %c0_6] : memref<2x1xf32, #tpu.memory_space<vmem>>, vector<2x1xf32>
    %cst_7 = arith.constant dense<0xFF800000> : vector<2x1xf32>
    %11 = vector.multi_reduction <maximumf>, %9, %cst_7 [1] : vector<2x8x1xf32> to vector<2x1xf32>
    %12 = arith.maximumf %10, %11 : vector<2x1xf32>
    %13 = arith.subf %10, %12 : vector<2x1xf32>
    %14 = math.exp %13 : vector<2x1xf32>
    %15 = vector.shape_cast %12 : vector<2x1xf32> to vector<2x1x1xf32>
    %16 = vector.broadcast %15 : vector<2x1x1xf32> to vector<2x8x1xf32>
    %17 = arith.subf %9, %16 : vector<2x8x1xf32>
    %18 = math.exp %17 : vector<2x8x1xf32>
    %c0_8 = arith.constant 0 : index
    %c0_9 = arith.constant 0 : index
    %19 = vector.load %arg6[%c0_8, %c0_9] : memref<2x1xf32, #tpu.memory_space<vmem>>, vector<2x1xf32>
    %20 = arith.mulf %14, %19 : vector<2x1xf32>
    %cst_10 = arith.constant dense<0.000000e+00> : vector<2x1xf32>
    %21 = vector.multi_reduction <add>, %18, %cst_10 [1] : vector<2x8x1xf32> to vector<2x1xf32>
    %22 = arith.addf %20, %21 : vector<2x1xf32>
    %c0_11 = arith.constant 0 : index
    %c0_12 = arith.constant 0 : index
    %23 = vector.load %arg6[%c0_11, %c0_12] : memref<2x1xf32, #tpu.memory_space<vmem>>, vector<2x1xf32>
    tpu.vector_store %arg6[%c0_11, %c0_12], %22 {strides = array<i32>} : memref<2x1xf32, #tpu.memory_space<vmem>>, vector<2x1xf32>,
    %c0_13 = arith.constant 0 : index
    %c0_14 = arith.constant 0 : index
    %24 = vector.load %arg7[%c0_13, %c0_14] : memref<2x32xf32, #tpu.memory_space<vmem>>, vector<2x32xf32>
    %25 = vector.broadcast %14 : vector<2x1xf32> to vector<2x32xf32>
    %26 = arith.mulf %25, %24 : vector<2x32xf32>
    %27 = vector.broadcast %18 : vector<2x8x1xf32> to vector<2x8x32xf32>
    %28 = arith.mulf %27, %4 : vector<2x8x32xf32>
    %cst_15 = arith.constant dense<0.000000e+00> : vector<2x32xf32>
    %29 = vector.multi_reduction <add>, %28, %cst_15 [1] : vector<2x8x32xf32> to vector<2x32xf32>
    %30 = arith.addf %26, %29 : vector<2x32xf32>
    %c0_16 = arith.constant 0 : index
    %c0_17 = arith.constant 0 : index
    %31 = vector.load %arg7[%c0_16, %c0_17] : memref<2x32xf32, #tpu.memory_space<vmem>>, vector<2x32xf32>
    tpu.vector_store %arg7[%c0_16, %c0_17], %30 {strides = array<i32>} : memref<2x32xf32, #tpu.memory_space<vmem>>, vector<2x32xf32>,
    %c0_18 = arith.constant 0 : index
    %c0_19 = arith.constant 0 : index
    %32 = vector.load %arg5[%c0_18, %c0_19] : memref<2x1xf32, #tpu.memory_space<vmem>>, vector<2x1xf32>
    tpu.vector_store %arg5[%c0_18, %c0_19], %12 {strides = array<i32>} : memref<2x1xf32, #tpu.memory_space<vmem>>, vector<2x1xf32>,
    %c0_i32_20 = arith.constant 0 : i32
    %33 = arith.cmpi eq, %arg1, %c0_i32_20 : i32
    %34 = arith.extui %33 : i1 to i32
    %c0_i32_21 = arith.constant 0 : i32
    %35 = arith.cmpi ne, %34, %c0_i32_21 : i32
    scf.if %35 {
      %c0_22 = arith.constant 0 : index
      %c0_23 = arith.constant 0 : index
      %36 = vector.load %arg6[%c0_22, %c0_23] : memref<2x1xf32, #tpu.memory_space<vmem>>, vector<2x1xf32>
      %37 = tpu.reciprocal %36 {approx = true} : vector<2x1xf32> -> vector<2x1xf32>
      %38 = arith.mulf %36, %37 : vector<2x1xf32>
      %cst_24 = arith.constant 2.000000e+00 : f32
      %39 = vector.broadcast %cst_24 : f32 to vector<2x1xf32>
      %40 = arith.subf %39, %38 : vector<2x1xf32>
      %41 = arith.mulf %37, %40 : vector<2x1xf32>
      %c0_25 = arith.constant 0 : index
      %c0_26 = arith.constant 0 : index
      %42 = vector.load %arg7[%c0_25, %c0_26] : memref<2x32xf32, #tpu.memory_space<vmem>>, vector<2x32xf32>
      %43 = vector.broadcast %41 : vector<2x1xf32> to vector<2x32xf32>
      %44 = arith.mulf %42, %43 : vector<2x32xf32>
      %c0_27 = arith.constant 0 : index
      %c0_28 = arith.constant 0 : index
      %45 = vector.load %arg4[%c0_27, %c0_28] : memref<2x32xf32, #tpu.memory_space<vmem>>, vector<2x32xf32>
      tpu.vector_store %arg4[%c0_27, %c0_28], %44 {strides = array<i32>} : memref<2x32xf32, #tpu.memory_space<vmem>>, vector<2x32xf32>,
    } else {
    }
    return
  }
  func.func @transform_0(%arg0: i32, %arg1: i32) -> (i32, i32) {
    %c0_i32 = arith.constant 0 : i32
    %c0_i32_0 = arith.constant 0 : i32
    return %arg0, %c0_i32 : i32, i32
  }
  func.func @transform_1(%arg0: i32, %arg1: i32) -> (i32, i32, i32) {
    %c0_i32 = arith.constant 0 : i32
    %c0_i32_0 = arith.constant 0 : i32
    return %arg0, %arg1, %c0_i32 : i32, i32, i32
  }
  func.func @transform_2(%arg0: i32, %arg1: i32) -> (i32, i32) {
    %c0_i32 = arith.constant 0 : i32
    %c0_i32_0 = arith.constant 0 : i32
    return %arg0, %c0_i32 : i32, i32
  }
}

</mosaic_0001>

<llo_original>
// kernel: tpu_custom_call.1
$region0: #{tpu_custom_call.1}
  #allocation0 [shape = 'u32[]', space=smem, size = 0x4, offset = 0x4, fixed_abs, tag = 'smem constant byte address 0x4 - core index']
  #allocation1 [shape = 'u32[144,128]{1,0:T(1,128)}', space=vmem, size = 0x12000, scoped, tag = 'internal scratch']
  #allocation2 [shape = 'f32[2,1]{1,0:T(2,128)}', space=vmem, size = 0x400, scoped, tag = 'scratch operand']
  #allocation3 [shape = 'f32[2,1]{1,0:T(2,128)}', space=vmem, size = 0x400, scoped, tag = 'scratch operand']
  #allocation4 [shape = 'f32[2,32]{1,0:T(2,128)}', space=vmem, size = 0x400, scoped, tag = 'scratch operand']
  %s0 = inlined_call_operand.hbm [shape: f32[2,32], index: 0, kind: input, shape index: {}]
  %s1 = inlined_call_operand.hbm [shape: f32[2,8,32], index: 1, kind: input, shape index: {}]
  %s2 = inlined_call_operand.hbm [shape: f32[2,32], index: 2, kind: output, shape index: {}]
  %s3 = sld [smem:[#allocation0]]
  $region34: #{tpu_custom_call.1} parent=0
    _
  %s5 = ssub.s32 1, %s3
  %s6 = scalar_select 0, %s5, %s3
  $region1: #{tpu_custom_call.1} parent=0
    #allocation5 [shape = 'u8[1024]{0}', space=vmem, size = 0x400, scoped, tag = 'input window, operand 0, single buffered']
    #allocation6 [shape = 's32[1]{0}', space=sflag, size = 0x4, scoped, tag = 'scoped memory for tpu_custom_call.1']
    #allocation7 [shape = 's32[1]{0}', space=sflag, size = 0x4, scoped, tag = 'scoped memory for tpu_custom_call.1']
    #allocation8 [shape = 'u8[8192]{0}', space=vmem, size = 0x2000, scoped, tag = 'input window, operand 1, single buffered']
    #allocation9 [shape = 's32[1]{0}', space=sflag, size = 0x4, scoped, tag = 'scoped memory for tpu_custom_call.1']
    #allocation10 [shape = 'u8[1024]{0}', space=vmem, size = 0x400, scoped, tag = 'output window, operand 0, single buffered']
    %7 = vsyncpa [#allocation6], 0
    %8 = vsyncpa [#allocation9], 0
    %9 = vsyncpa [#allocation7], 0
    // Predicated region
    $region2: #{tpu_custom_call.1} parent=1 // pred_check
      _
    $region3: #{tpu_custom_call.1} parent=1 // pred_check_branch
      %11 = sbr.rel (0) target = $region5
    $region4: #{tpu_custom_call.1} parent=1 // pred_region
      %s13 = ssub.s32 32, 32
      %14 = vsyncadd [#allocation6], %s13
      %s16 = sshll.u32 [#allocation5], 4
      %s17 = int_to_ptr.vmem [resolvable:$true] %s16
      %19 = dma.hbm_to_vmem [thread:$0]  %s0, 32, %s17, [#allocation6]
    $region5: #{tpu_custom_call.1} parent=1 // pred_fallthru
      _
    // Predicated region
    $region6: #{tpu_custom_call.1} parent=1 // pred_check
      _
    $region7: #{tpu_custom_call.1} parent=1 // pred_check_branch
      %21 = sbr.rel (0) target = $region9
    $region8: #{tpu_custom_call.1} parent=1 // pred_region
      %s23 = ssub.s32 256, 256
      %24 = vsyncadd [#allocation9], %s23
      %s25 = sshll.u32 [#allocation8], 4
      %s26 = int_to_ptr.vmem [resolvable:$true] %s25
      %31 = dma.hbm_to_vmem [thread:$0]  %s1, 256, %s26, [#allocation9], 128, 128, 8
    $region9: #{tpu_custom_call.1} parent=1 // pred_fallthru
      _
    // Predicated region
    $region10: #{tpu_custom_call.1} parent=1 // pred_check
      _
    $region11: #{tpu_custom_call.1} parent=1 // pred_check_branch
      %33 = sbr.rel (0) target = $region13
    $region12: #{tpu_custom_call.1} parent=1 // pred_region
      %34 = dma.done [#allocation6], 32
    $region13: #{tpu_custom_call.1} parent=1 // pred_fallthru
      _
    // Predicated region
    $region14: #{tpu_custom_call.1} parent=1 // pred_check
      _
    $region15: #{tpu_custom_call.1} parent=1 // pred_check_branch
      %36 = sbr.rel (0) target = $region17
    $region16: #{tpu_custom_call.1} parent=1 // pred_region
      %37 = dma.done [#allocation9], 256
    $region17: #{tpu_custom_call.1} parent=1 // pred_fallthru
      _
    %p38 = scmp.eq.s32.totalorder 0, 0
    // Predicated region
    $region18: #{tpu_custom_call.1} parent=1 // pred_check
      %p39 = pneg %p38
    $region19: #{tpu_custom_call.1} parent=1 // pred_check_branch
      %41 = sbr.rel (%p39) target = $region21
    $region20: #{tpu_custom_call.1} parent=1 // pred_region
      %vm42 = vcmask 1024
      %43 = vst.msk [vmem:[#allocation2] sm:$0x3] %vm42, -inf
      %44 = vst.msk [vmem:[#allocation3] sm:$0x3] %vm42, 0.0
      %vm45 = vcmask 254976
      %46 = vst.msk [vmem:[#allocation4] sm:$0x3] %vm45, 0.0
    $region21: #{tpu_custom_call.1} parent=1 // pred_fallthru
      _
    %v47 = vld [vmem:[#allocation5] sm:$0x3]
    %v48 = vld [vmem:[#allocation8] sm:$0xff]
    %v49 = vld [vmem:[#allocation8 + $0x8] sm:$0xff]
    %v52 = vunpack.c.l.s4 1966171168
    %v53 = vunpack.c.0.s8 %v52
    %v54 = vlaneseq
    %v55 = vshrl.u32 %v54, 7
    %v56 = vsub.s32 %v53, %v55
    %v57 = vrot.slane %v47, %v56
    %v58 = vcombine.high %v57, %v57
    %v60 = vunpack.c.l.s4 1966171168
    %v61 = vunpack.c.0.s8 %v60
    %v62 = vlaneseq
    %v63 = vshrl.u32 %v62, 7
    %v64 = vsub.s32 %v61, %v63
    %v65 = vrot.slane %v57, %v64
    %v67 = vunpack.c.l.s4 1966171168
    %v68 = vunpack.c.0.s8 %v67
    %v69 = vlaneseq
    %v70 = vshrl.u32 %v69, 7
    %v71 = vsub.s32 %v68, %v70
    %v72 = vrot.slane %v58, %v71
    %v73 = vlaneseq
    %v74 = vshrl.u32 %v73, 7
    %v75 = vsub.s32 0, %v74
    %v76 = vrot.slane %v65, %v75
    %v77 = vlaneseq
    %v78 = vshrl.u32 %v77, 7
    %v79 = vsub.s32 0, %v78
    %v80 = vrot.slane %v72, %v79
    %v83 = vmul.f32 %v48, %v76
    %v84 = vmul.f32 %v49, %v80
    %vm85 = vcmask 261120
    %v86 = vsel %vm85, %v83, 0.0
    %87 = vadd.xlane.f32.xlu0 %v86
    %v88 = vpop.xlane.xlu0 %87
    %v89 = vsel %vm85, %v84, 0.0
    %90 = vadd.xlane.f32.xlu0 %v89
    %v91 = vpop.xlane.xlu0 %90
    %v92 = vld [vmem:[#allocation2] sm:$0x3]
    %v93 = vrot.slane %v88, 4
    %v94 = vmax.f32 %v88, %v93
    %v95 = vrot.slane %v94, 2
    %v96 = vmax.f32 %v94, %v95
    %v97 = vrot.slane %v96, 1
    %v98 = vmax.f32 %v96, %v97
    %v99 = vrot.slane %v91, 4
    %v100 = vmax.f32 %v91, %v99
    %v101 = vrot.slane %v100, 2
    %v102 = vmax.f32 %v100, %v101
    %v103 = vrot.slane %v102, 1
    %v104 = vmax.f32 %v102, %v103
    %vm107 = vcmask 1041409
    %v108 = vsel %vm107, %v104, %v98
    %v110 = vmax.f32 %v92, %v108
    %v111 = vsub.f32 %v92, %v110
    %v112 = vmul.f32 %v111, 1.442695
    %v113 = vpow.pop %v112
    %v116 = vunpack.c.l.s4 1966171168
    %v117 = vunpack.c.0.s8 %v116
    %v118 = vlaneseq
    %v119 = vshrl.u32 %v118, 7
    %v120 = vsub.s32 %v117, %v119
    %v121 = vrot.slane %v110, %v120
    %v122 = vcombine.high %v121, %v121
    %v124 = vunpack.c.l.s4 1966171168
    %v125 = vunpack.c.0.s8 %v124
    %v126 = vlaneseq
    %v127 = vshrl.u32 %v126, 7
    %v128 = vsub.s32 %v125, %v127
    %v129 = vrot.slane %v121, %v128
    %v131 = vunpack.c.l.s4 1966171168
    %v132 = vunpack.c.0.s8 %v131
    %v133 = vlaneseq
    %v134 = vshrl.u32 %v133, 7
    %v135 = vsub.s32 %v132, %v134
    %v136 = vrot.slane %v122, %v135
    %v137 = vlaneseq
    %v138 = vshrl.u32 %v137, 7
    %v139 = vsub.s32 0, %v138
    %v140 = vrot.slane %v129, %v139
    %v141 = vlaneseq
    %v142 = vshrl.u32 %v141, 7
    %v143 = vsub.s32 0, %v142
    %v144 = vrot.slane %v136, %v143
    %v147 = vsub.f32 %v88, %v140
    %v148 = vsub.f32 %v91, %v144
    %v149 = vmul.f32 %v147, 1.442695
    %v150 = vpow.pop %v149
    %v151 = vmul.f32 %v148, 1.442695
    %v152 = vpow.pop %v151
    %v153 = vld [vmem:[#allocation3] sm:$0x3]
    %v154 = vmul.f32 %v113, %v153
    %vm155 = vcmask 7168
    %v156 = vsel %vm155, %v150, 0.0
    %v157 = vrot.slane %v156, 4
    %v158 = vadd.f32 %v156, %v157
    %v159 = vrot.slane %v158, 2
    %v160 = vadd.f32 %v158, %v159
    %v161 = vrot.slane %v160, 1
    %v162 = vadd.f32 %v160, %v161
    %v163 = vsel %vm155, %v152, 0.0
    %v164 = vrot.slane %v163, 4
    %v165 = vadd.f32 %v163, %v164
    %v166 = vrot.slane %v165, 2
    %v167 = vadd.f32 %v165, %v166
    %v168 = vrot.slane %v167, 1
    %v169 = vadd.f32 %v167, %v168
    %v172 = vsel %vm107, %v169, %v162
    %v174 = vadd.f32 %v154, %v172
    %vm175 = vcmask 1024
    %176 = vst.msk [vmem:[#allocation3] sm:$0x3] %vm175, %v174
    %v177 = vld [vmem:[#allocation4] sm:$0x3]
    %179 = vset.pattern.permute.xlu0 0
    %180 = vperm.xlu0 %179, %v113
    %v181 = vpop.permute.xlu0 %180
    %v183 = vmul.f32 %v181, %v177
    %185 = vset.pattern.permute.xlu0 0
    %186 = vperm.xlu0 %185, %v150
    %v187 = vpop.permute.xlu0 %186
    %190 = vset.pattern.permute.xlu0 0
    %191 = vperm.xlu0 %190, %v152
    %v192 = vpop.permute.xlu0 %191
    %v194 = vmul.f32 %v187, %v48
    %v195 = vmul.f32 %v192, %v49
    %v196 = vsel %vm85, %v194, 0.0
    %v197 = vrot.slane %v196, 4
    %v198 = vadd.f32 %v196, %v197
    %v199 = vrot.slane %v198, 2
    %v200 = vadd.f32 %v198, %v199
    %v201 = vrot.slane %v200, 1
    %v202 = vadd.f32 %v200, %v201
    %v203 = vsel %vm85, %v195, 0.0
    %v204 = vrot.slane %v203, 4
    %v205 = vadd.f32 %v203, %v204
    %v206 = vrot.slane %v205, 2
    %v207 = vadd.f32 %v205, %v206
    %v208 = vrot.slane %v207, 1
    %v209 = vadd.f32 %v207, %v208
    %v212 = vsel %vm107, %v209, %v202
    %v214 = vadd.f32 %v183, %v212
    %vm215 = vcmask 254976
    %216 = vst.msk [vmem:[#allocation4] sm:$0x3] %vm215, %v214
    %217 = vst.msk [vmem:[#allocation2] sm:$0x3] %vm175, %v110
    // Predicated region
    $region22: #{tpu_custom_call.1} parent=1 // pred_check
      %p218 = pneg %p38
    $region23: #{tpu_custom_call.1} parent=1 // pred_check_branch
      %220 = sbr.rel (%p218) target = $region25
    $region24: #{tpu_custom_call.1} parent=1 // pred_region
      %v221 = vld [vmem:[#allocation3] sm:$0x3]
      %v222 = vrcp.pop %v221
      %v223 = vmul.f32 %v221, %v222
      %v224 = vsub.f32 2.0, %v223
      %v225 = vmul.f32 %v222, %v224
      %v226 = vld [vmem:[#allocation4] sm:$0x3]
      %228 = vset.pattern.permute.xlu0 0
      %229 = vperm.xlu0 %228, %v225
      %v230 = vpop.permute.xlu0 %229
      %v232 = vmul.f32 %v226, %v230
      %233 = vst.msk [vmem:[#allocation10] sm:$0x3] %vm215, %v232
    $region25: #{tpu_custom_call.1} parent=1 // pred_fallthru
      _
    // Predicated region
    $region26: #{tpu_custom_call.1} parent=1 // pred_check
      _
    $region27: #{tpu_custom_call.1} parent=1 // pred_check_branch
      %235 = sbr.rel (0) target = $region29
    $region28: #{tpu_custom_call.1} parent=1 // pred_region
      %s237 = ssub.s32 32, 32
      %238 = vsyncadd [#allocation7], %s237
      %s240 = sshll.u32 [#allocation10], 4
      %s241 = int_to_ptr.vmem [resolvable:$true] %s240
      %243 = dma.vmem_to_hbm [thread:$0]  %s241, 32, %s2, [#allocation7]
    $region29: #{tpu_custom_call.1} parent=1 // pred_fallthru
      _
    // Predicated region
    $region30: #{tpu_custom_call.1} parent=1 // pred_check
      _
    $region31: #{tpu_custom_call.1} parent=1 // pred_check_branch
      %245 = sbr.rel (0) target = $region33
    $region32: #{tpu_custom_call.1} parent=1 // pred_region
      %246 = dma.done [#allocation7], 32
    $region33: #{tpu_custom_call.1} parent=1 // pred_fallthru
      _
    %247 = vsyncpa [#allocation6], 1
    %248 = vsyncpa [#allocation9], 1
    %249 = vsyncpa [#allocation7], 1

</llo_original>
